<compile_context>
chip_gen: v7x
topology: tpu7x:2x2x1
jax: 0.10.0
libtpu: 0.0.40
codegen_flags: <defaults>
</compile_context>

<pallas_src>
import jax
import jax.numpy as jnp
from jax.experimental import pallas as pl
from jax.experimental.pallas import tpu as pltpu

H1, H2 = 256, 512  # hidden sizes fixed by the PyTorch module


def mlp_kernel(x_ref, w1_ref, b1_ref, w2_ref, b2_ref, w3_ref, b3_ref, o_ref):
    # Three MXU matmuls (bf16 in, f32 accumulate) with f32 bias + ReLU epilogues.
    x = x_ref[...].astype(w1_ref.dtype)                    # f32 -> bf16 (VPU)
    h1 = jnp.dot(x, w1_ref[...], preferred_element_type=jnp.float32) + b1_ref[...]
    h1 = jnp.maximum(h1, 0.0).astype(w2_ref.dtype)
    h2 = jnp.dot(h1, w2_ref[...], preferred_element_type=jnp.float32) + b2_ref[...]
    h2 = jnp.maximum(h2, 0.0).astype(w3_ref.dtype)
    out = jnp.dot(h2, w3_ref[...], preferred_element_type=jnp.float32) + b3_ref[...]
    o_ref[...] = out.astype(o_ref.dtype)


def prepare_params(params, compute_dtype=jnp.bfloat16):
    """One-time param prep (call once, reuse): weights -> compute dtype, biases f32."""
    return {
        "w1": jnp.asarray(params["w1"], compute_dtype),
        "w2": jnp.asarray(params["w2"], compute_dtype),
        "w3": jnp.asarray(params["w3"], compute_dtype),
        "b1": jnp.asarray(params["b1"], jnp.float32).reshape(1, H1),
        "b2": jnp.asarray(params["b2"], jnp.float32).reshape(1, H2),
        "b3": jnp.asarray(params["b3"], jnp.float32).reshape(1, -1),
    }


def _vmem_budget_bytes():
    # Generation-aware VMEM cap: ~85% of the chip's actual per-core VMEM.
    try:
        cap = int(pltpu.get_tpu_info().vmem_capacity_bytes)
    except Exception:  # pragma: no cover - conservative fallback (v7x per-TC)
        cap = 64 * 1024 * 1024
    return int(cap * 0.85)


def _round_up(v, m):
    return (v + m - 1) // m * m


def _choose_tb(B, F, x_bytes, out_bytes, budget):
    """Largest batch tile that fits the VMEM budget; split across 2 TCs for B>=256."""
    # bytes that scale with tb: double-buffered x/out tiles + f32 intermediates
    per_row = 2 * F * x_bytes + 2 * F * out_bytes + (H1 + H2) * 4
    # resident (single-buffered) weights + biases
    fixed = (F * H1 + H1 * H2 + H2 * F) * 2 + (H1 + H2 + F) * 4
    avail = max(budget // 2 - fixed, 16 * per_row)          # keep 2x headroom
    tb_cap = min(1024, max(16, (avail // per_row) // 16 * 16))
    if B < 256:
        return min(B, tb_cap)
    # >= 2 grid steps so both v7x TensorCores get sharded work (free on v5e/v6e)
    return min(_round_up(pl.cdiv(B, 2), 16), tb_cap)


def mlp_forward(x, prep, *, tb=None, out_dtype=None):
    """x: (B, F). prep: output of prepare_params (weights stored as (in, out))."""
    B, F = x.shape
    assert prep["w1"].shape == (F, H1), "prepared params do not match input size"
    compute_dtype = prep["w1"].dtype
    if out_dtype is None:
        out_dtype = compute_dtype                           # bf16 output (perf)

    x_bytes = jnp.dtype(x.dtype).itemsize
    out_bytes = jnp.dtype(out_dtype).itemsize
    c_bytes = jnp.dtype(compute_dtype).itemsize

    budget = _vmem_budget_bytes()
    if tb is None:
        tb = _choose_tb(B, F, x_bytes, out_bytes, budget)
    tb = min(tb, max(B, 1))
    grid = (pl.cdiv(B, tb),)

    need = (2 * tb * F * (x_bytes + out_bytes)              # double-buffered tiles
            + (F * H1 + H1 * H2 + H2 * F) * c_bytes         # resident weights
            + (H1 + H2 + F) * 4                             # resident biases
            + tb * (H1 + H2) * 4)                           # f32 intermediates
    vmem_limit = int(min(budget, max(2 * need, 32 * 1024 * 1024)))

    cost = pl.CostEstimate(
        flops=2 * B * (F * H1 + H1 * H2 + H2 * F),
        transcendentals=0,
        bytes_accessed=int(B * F * (x_bytes + out_bytes)
                           + (F * H1 + H1 * H2 + H2 * F) * c_bytes
                           + (H1 + H2 + F) * 4),
    )

    # Grid-invariant (resident) operands: single-buffer to halve their VMEM.
    def resident(shape):
        return pl.BlockSpec(shape, lambda i: (0,) * len(shape),
                            pipeline_mode=pl.Buffered(1))

    out = pl.pallas_call(
        mlp_kernel,
        out_shape=jax.ShapeDtypeStruct((B, F), out_dtype),
        grid_spec=pltpu.PrefetchScalarGridSpec(
            num_scalar_prefetch=0,
            grid=grid,
            in_specs=[
                pl.BlockSpec((tb, F), lambda i: (i, 0)),    # x tile (batch-tiled)
                resident((F, H1)),                          # w1
                resident((1, H1)),                          # b1
                resident((H1, H2)),                         # w2
                resident((1, H2)),                          # b2
                resident((H2, F)),                          # w3
                resident((1, F)),                           # b3
            ],
            out_specs=pl.BlockSpec((tb, F), lambda i: (i, 0)),
        ),
        compiler_params=pltpu.CompilerParams(
            dimension_semantics=("parallel",),              # megacore-shards batch
            vmem_limit_bytes=vmem_limit,
        ),
        cost_estimate=cost,
    )(x, prep["w1"], prep["b1"], prep["w2"], prep["b2"], prep["w3"], prep["b3"])
    return out


def init_params(key, input_size):
    """Deterministic init matching nn.Linear shapes (stored as (in, out))."""
    k1, k2, k3, k4, k5, k6 = jax.random.split(key, 6)

    def linear_init(kw, kb, fan_in, fan_out):
        # PyTorch-style uniform(-1/sqrt(fan_in), 1/sqrt(fan_in))
        bound = 1.0 / jnp.sqrt(jnp.float32(fan_in))
        w = jax.random.uniform(kw, (fan_in, fan_out), jnp.float32, -bound, bound)
        b = jax.random.uniform(kb, (1, fan_out), jnp.float32, -bound, bound)
        return w, b

    w1, b1 = linear_init(k1, k2, input_size, H1)
    w2, b2 = linear_init(k3, k4, H1, H2)
    w3, b3 = linear_init(k5, k6, H2, input_size)
    return {"w1": w1, "b1": b1, "w2": w2, "b2": b2, "w3": w3, "b3": b3}


def mlp_reference(x, p):
    h1 = jnp.maximum(x @ p["w1"] + p["b1"], 0.0)
    h2 = jnp.maximum(h1 @ p["w2"] + p["b2"], 0.0)
    return h2 @ p["w3"] + p["b3"]


if __name__ == "__main__":
    key = jax.random.PRNGKey(0)
    kx, kp = jax.random.split(key)

    B, F = 8, 32  # small batch, input_size=32
    x = jax.random.normal(kx, (B, F), jnp.float32)
    params = init_params(kp, F)

    prep = prepare_params(params)          # one-time weight cast (hoisted)
    out = mlp_forward(x, prep)
    out = jax.block_until_ready(out)

    ref = mlp_reference(x, params)
    assert out.shape == (B, F)
    # bf16 MXU inputs/output with f32 accumulation -> ~1e-2-level tolerance.
    assert jnp.allclose(out.astype(jnp.float32), ref, atol=5e-2, rtol=5e-2), \
        "mismatch vs reference"

    print("KERNEL_OK")
</pallas_src>

<mosaic_0001>
module attributes {stable_mosaic.version = 11 : i64} {
  func.func @mlp_kernel(%arg0: i32, %arg1: memref<8x32xf32, #tpu.memory_space<vmem>>, %arg2: memref<32x256xbf16, #tpu.memory_space<vmem>>, %arg3: memref<1x256xf32, #tpu.memory_space<vmem>>, %arg4: memref<256x512xbf16, #tpu.memory_space<vmem>>, %arg5: memref<1x512xf32, #tpu.memory_space<vmem>>, %arg6: memref<512x32xbf16, #tpu.memory_space<vmem>>, %arg7: memref<1x32xf32, #tpu.memory_space<vmem>>, %arg8: memref<8x32xbf16, #tpu.memory_space<vmem>>) attributes {dimension_semantics = [#tpu.dimension_semantics<parallel>], iteration_bounds = array<i64: 1>, scalar_prefetch = 0 : i64, scratch_operands = 0 : i64, tpu.core_type = #tpu.core_type<tc>, window_params = [{transform_indices = @transform_0, window_bounds = array<i64: 8, 32>}, {pipeline_mode = #tpu.pipeline_mode<synchronous>, transform_indices = @transform_1, window_bounds = array<i64: 32, 256>}, {pipeline_mode = #tpu.pipeline_mode<synchronous>, transform_indices = @transform_2, window_bounds = array<i64: 1, 256>}, {pipeline_mode = #tpu.pipeline_mode<synchronous>, transform_indices = @transform_3, window_bounds = array<i64: 256, 512>}, {pipeline_mode = #tpu.pipeline_mode<synchronous>, transform_indices = @transform_4, window_bounds = array<i64: 1, 512>}, {pipeline_mode = #tpu.pipeline_mode<synchronous>, transform_indices = @transform_5, window_bounds = array<i64: 512, 32>}, {pipeline_mode = #tpu.pipeline_mode<synchronous>, transform_indices = @transform_6, window_bounds = array<i64: 1, 32>}, {transform_indices = @transform_7, window_bounds = array<i64: 8, 32>}]} {
    %c0 = arith.constant 0 : index
    %c0_0 = arith.constant 0 : index
    %0 = vector.load %arg1[%c0, %c0_0] : memref<8x32xf32, #tpu.memory_space<vmem>>, vector<8x32xf32>
    %1 = arith.truncf %0 : vector<8x32xf32> to vector<8x32xbf16>
    %c0_1 = arith.constant 0 : index
    %c0_2 = arith.constant 0 : index
    %2 = vector.load %arg2[%c0_1, %c0_2] : memref<32x256xbf16, #tpu.memory_space<vmem>>, vector<32x256xbf16>
    %cst = arith.constant dense<0.000000e+00> : vector<8x256xf32>
    %3 = tpu.matmul %1, %2, %cst {dimension_numbers = #tpu.dot_dimension_numbers<[1], [0], [0], [1], [0, 0, 1, 1], [], []>} : vector<8x32xbf16>, vector<32x256xbf16>, vector<8x256xf32> -> vector<8x256xf32>
    %c0_3 = arith.constant 0 : index
    %c0_4 = arith.constant 0 : index
    %4 = vector.load %arg3[%c0_3, %c0_4] : memref<1x256xf32, #tpu.memory_space<vmem>>, vector<1x256xf32>
    %5 = vector.broadcast %4 : vector<1x256xf32> to vector<8x256xf32>
    %6 = arith.addf %3, %5 : vector<8x256xf32>
    %cst_5 = arith.constant 0.000000e+00 : f32
    %7 = vector.broadcast %cst_5 : f32 to vector<8x256xf32>
    %8 = arith.maximumf %6, %7 : vector<8x256xf32>
    %9 = arith.truncf %8 : vector<8x256xf32> to vector<8x256xbf16>
    %c0_6 = arith.constant 0 : index
    %c0_7 = arith.constant 0 : index
    %10 = vector.load %arg4[%c0_6, %c0_7] : memref<256x512xbf16, #tpu.memory_space<vmem>>, vector<256x512xbf16>
    %cst_8 = arith.constant dense<0.000000e+00> : vector<8x512xf32>
    %11 = tpu.matmul %9, %10, %cst_8 {dimension_numbers = #tpu.dot_dimension_numbers<[1], [0], [0], [1], [0, 0, 1, 1], [], []>} : vector<8x256xbf16>, vector<256x512xbf16>, vector<8x512xf32> -> vector<8x512xf32>
    %c0_9 = arith.constant 0 : index
    %c0_10 = arith.constant 0 : index
    %12 = vector.load %arg5[%c0_9, %c0_10] : memref<1x512xf32, #tpu.memory_space<vmem>>, vector<1x512xf32>
    %13 = vector.broadcast %12 : vector<1x512xf32> to vector<8x512xf32>
    %14 = arith.addf %11, %13 : vector<8x512xf32>
    %cst_11 = arith.constant 0.000000e+00 : f32
    %15 = vector.broadcast %cst_11 : f32 to vector<8x512xf32>
    %16 = arith.maximumf %14, %15 : vector<8x512xf32>
    %17 = arith.truncf %16 : vector<8x512xf32> to vector<8x512xbf16>
    %c0_12 = arith.constant 0 : index
    %c0_13 = arith.constant 0 : index
    %18 = vector.load %arg6[%c0_12, %c0_13] : memref<512x32xbf16, #tpu.memory_space<vmem>>, vector<512x32xbf16>
    %cst_14 = arith.constant dense<0.000000e+00> : vector<8x32xf32>
    %19 = tpu.matmul %17, %18, %cst_14 {dimension_numbers = #tpu.dot_dimension_numbers<[1], [0], [0], [1], [0, 0, 1, 1], [], []>} : vector<8x512xbf16>, vector<512x32xbf16>, vector<8x32xf32> -> vector<8x32xf32>
    %c0_15 = arith.constant 0 : index
    %c0_16 = arith.constant 0 : index
    %20 = vector.load %arg7[%c0_15, %c0_16] : memref<1x32xf32, #tpu.memory_space<vmem>>, vector<1x32xf32>
    %21 = vector.broadcast %20 : vector<1x32xf32> to vector<8x32xf32>
    %22 = arith.addf %19, %21 : vector<8x32xf32>
    %23 = arith.truncf %22 : vector<8x32xf32> to vector<8x32xbf16>
    %c0_17 = arith.constant 0 : index
    %c0_18 = arith.constant 0 : index
    %24 = vector.load %arg8[%c0_17, %c0_18] : memref<8x32xbf16, #tpu.memory_space<vmem>>, vector<8x32xbf16>
    tpu.vector_store %arg8[%c0_17, %c0_18], %23 {strides = array<i32>} : memref<8x32xbf16, #tpu.memory_space<vmem>>, vector<8x32xbf16>,
    return
  }
  func.func @transform_0(%arg0: i32) -> (i32, i32) {
    %c0_i32 = arith.constant 0 : i32
    %c0_i32_0 = arith.constant 0 : i32
    return %arg0, %c0_i32 : i32, i32
  }
  func.func @transform_1(%arg0: i32) -> (i32, i32) {
    %c0_i32 = arith.constant 0 : i32
    %c0_i32_0 = arith.constant 0 : i32
    %c0_i32_1 = arith.constant 0 : i32
    return %c0_i32, %c0_i32_0 : i32, i32
  }
  func.func @transform_2(%arg0: i32) -> (i32, i32) {
    %c0_i32 = arith.constant 0 : i32
    %c0_i32_0 = arith.constant 0 : i32
    %c0_i32_1 = arith.constant 0 : i32
    return %c0_i32, %c0_i32_0 : i32, i32
  }
  func.func @transform_3(%arg0: i32) -> (i32, i32) {
    %c0_i32 = arith.constant 0 : i32
    %c0_i32_0 = arith.constant 0 : i32
    %c0_i32_1 = arith.constant 0 : i32
    return %c0_i32, %c0_i32_0 : i32, i32
  }
  func.func @transform_4(%arg0: i32) -> (i32, i32) {
    %c0_i32 = arith.constant 0 : i32
    %c0_i32_0 = arith.constant 0 : i32
    %c0_i32_1 = arith.constant 0 : i32
    return %c0_i32, %c0_i32_0 : i32, i32
  }
  func.func @transform_5(%arg0: i32) -> (i32, i32) {
    %c0_i32 = arith.constant 0 : i32
    %c0_i32_0 = arith.constant 0 : i32
    %c0_i32_1 = arith.constant 0 : i32
    return %c0_i32, %c0_i32_0 : i32, i32
  }
  func.func @transform_6(%arg0: i32) -> (i32, i32) {
    %c0_i32 = arith.constant 0 : i32
    %c0_i32_0 = arith.constant 0 : i32
    %c0_i32_1 = arith.constant 0 : i32
    return %c0_i32, %c0_i32_0 : i32, i32
  }
  func.func @transform_7(%arg0: i32) -> (i32, i32) {
    %c0_i32 = arith.constant 0 : i32
    %c0_i32_0 = arith.constant 0 : i32
    return %arg0, %c0_i32 : i32, i32
  }
}

</mosaic_0001>

<llo_original>
// kernel: tpu_custom_call.1
$region0: #{tpu_custom_call.1}
  #allocation0 [shape = 'u32[]', space=smem, size = 0x4, offset = 0x4, fixed_abs, tag = 'smem constant byte address 0x4 - core index']
  #allocation1 [shape = 'u32[144,128]{1,0:T(1,128)}', space=vmem, size = 0x12000, scoped, tag = 'internal scratch']
  %s0 = inlined_call_operand.vmem [shape: f32[8,32], index: 0, kind: input, shape index: {}]
  %s1 = inlined_call_operand.vmem [shape: bf16[32,256], index: 1, kind: input, shape index: {}]
  %s2 = inlined_call_operand.vmem [shape: f32[1,256], index: 2, kind: input, shape index: {}]
  %s3 = inlined_call_operand.hbm [shape: bf16[256,512], index: 3, kind: input, shape index: {}]
  %s4 = inlined_call_operand.vmem [shape: f32[1,512], index: 4, kind: input, shape index: {}]
  %s5 = inlined_call_operand.vmem [shape: bf16[512,32], index: 5, kind: input, shape index: {}]
  %s6 = inlined_call_operand.vmem [shape: f32[1,32], index: 6, kind: input, shape index: {}]
  %s7 = inlined_call_operand.hbm [shape: bf16[8,32], index: 7, kind: output, shape index: {}]
  %s8 = sld [smem:[#allocation0]]
  $region42: #{tpu_custom_call.1} parent=0
    _
  %s10 = ssub.s32 1, %s8
  %s11 = scalar_select 0, %s10, %s8
  $region1: #{tpu_custom_call.1} parent=0
    #allocation2 [shape = 'u8[262144]{0}', space=vmem, size = 0x40000, scoped, tag = 'input window, operand 3, single buffered']
    #allocation3 [shape = 's32[1]{0}', space=sflag, size = 0x4, scoped, tag = 'scoped memory for tpu_custom_call.1']
    #allocation4 [shape = 's32[1]{0}', space=sflag, size = 0x4, scoped, tag = 'scoped memory for tpu_custom_call.1']
    #allocation5 [shape = 'u8[2048]{0}', space=vmem, size = 0x800, scoped, tag = 'output window, operand 0, single buffered']
    %12 = vsyncpa [#allocation3], 0
    %13 = vsyncpa [#allocation4], 0
    // Predicated region
    $region2: #{tpu_custom_call.1} parent=1 // pred_check
      _
    $region3: #{tpu_custom_call.1} parent=1 // pred_check_branch
      %15 = sbr.rel (0) target = $region5
    $region4: #{tpu_custom_call.1} parent=1 // pred_region
      _
    $region5: #{tpu_custom_call.1} parent=1 // pred_fallthru
      _
    // Predicated region
    $region6: #{tpu_custom_call.1} parent=1 // pred_check
      _
    $region7: #{tpu_custom_call.1} parent=1 // pred_check_branch
      %17 = sbr.rel (0) target = $region9
    $region8: #{tpu_custom_call.1} parent=1 // pred_region
      _
    $region9: #{tpu_custom_call.1} parent=1 // pred_fallthru
      _
    // Predicated region
    $region10: #{tpu_custom_call.1} parent=1 // pred_check
      _
    $region11: #{tpu_custom_call.1} parent=1 // pred_check_branch
      %19 = sbr.rel (0) target = $region13
    $region12: #{tpu_custom_call.1} parent=1 // pred_region
      _
    $region13: #{tpu_custom_call.1} parent=1 // pred_fallthru
      _
    // Predicated region
    $region14: #{tpu_custom_call.1} parent=1 // pred_check
      _
    $region15: #{tpu_custom_call.1} parent=1 // pred_check_branch
      %21 = sbr.rel (0) target = $region17
    $region16: #{tpu_custom_call.1} parent=1 // pred_region
      %s23 = ssub.s32 8192, 8192
      %24 = vsyncadd [#allocation3], %s23
      %s25 = sshll.u32 [#allocation2], 4
      %s26 = int_to_ptr.vmem [resolvable:$true] %s25
      %31 = dma.hbm_to_vmem [thread:$0]  %s3, 8192, %s26, [#allocation3], 256, 256, 16
    $region17: #{tpu_custom_call.1} parent=1 // pred_fallthru
      _
    // Predicated region
    $region18: #{tpu_custom_call.1} parent=1 // pred_check
      _
    $region19: #{tpu_custom_call.1} parent=1 // pred_check_branch
      %33 = sbr.rel (0) target = $region21
    $region20: #{tpu_custom_call.1} parent=1 // pred_region
      _
    $region21: #{tpu_custom_call.1} parent=1 // pred_fallthru
      _
    // Predicated region
    $region22: #{tpu_custom_call.1} parent=1 // pred_check
      _
    $region23: #{tpu_custom_call.1} parent=1 // pred_check_branch
      %35 = sbr.rel (0) target = $region25
    $region24: #{tpu_custom_call.1} parent=1 // pred_region
      _
    $region25: #{tpu_custom_call.1} parent=1 // pred_fallthru
      _
    // Predicated region
    $region26: #{tpu_custom_call.1} parent=1 // pred_check
      _
    $region27: #{tpu_custom_call.1} parent=1 // pred_check_branch
      %37 = sbr.rel (0) target = $region29
    $region28: #{tpu_custom_call.1} parent=1 // pred_region
      _
    $region29: #{tpu_custom_call.1} parent=1 // pred_fallthru
      _
    // Predicated region
    $region30: #{tpu_custom_call.1} parent=1 // pred_check
      _
    $region31: #{tpu_custom_call.1} parent=1 // pred_check_branch
      %39 = sbr.rel (0) target = $region33
    $region32: #{tpu_custom_call.1} parent=1 // pred_region
      %40 = dma.done [#allocation3], 8192
    $region33: #{tpu_custom_call.1} parent=1 // pred_fallthru
      _
    %v42 = vld [vmem:[%s0] sm:$0xff]
    %v43 = vpack.c.bf16 %v42, %v42
    %v44 = vld [vmem:[%s1] sm:$0xff]
    %v45 = vld [vmem:[%s1 + $0x8] sm:$0xff]
    %v46 = vld [vmem:[%s1 + $0x10] sm:$0xff]
    %v47 = vld [vmem:[%s1 + $0x18] sm:$0xff]
    %v48 = vld [vmem:[%s2] sm:$0x3]
    %v50 = vlaneseq
    %v51 = vshrl.u32 %v50, 7
    %v52 = vsub.s32 0, %v51
    %v53 = vrot.slane %v48, %v52
    %v54 = vlaneseq
    %v55 = vshrl.u32 %v54, 7
    %v56 = vsub.s32 1, %v55
    %v57 = vrot.slane %v48, %v56
    %v64 = vunpack.c.l.b16 %v44
    %v65 = vunpack.c.h.b16 %v44
    %v66 = vunpack.c.l.b16 %v45
    %v67 = vunpack.c.h.b16 %v45
    %v68 = vunpack.c.l.b16 %v46
    %v69 = vunpack.c.h.b16 %v46
    %v70 = vunpack.c.l.b16 %v47
    %v71 = vunpack.c.h.b16 %v47
    %v72 = vpack.c.b16 %v66, %v64
    %v73 = vpack.c.b16 %v67, %v65
    %v74 = vpack.c.b16 %v70, %v68
    %v75 = vpack.c.b16 %v71, %v69
    %vm80 = vcmask 261120
    %v82 = vsel %vm80, %v43, 0
    %84 = vmatprep.subr.bf16.mxu0 %v73
    %85 = vmatpush1.bf16.msra.mxu0 %v72
    %86 = vmatprep.subr.bf16.mxu0 %v75
    %87 = vmatpush1.bf16.msra.mxu0 %v74
    %88 = vmatprep.subr.bf16.mxu0 0
    %89 = vmatpush1.bf16.msra.mxu0 0
    %90 = vmatprep.subr.bf16.mxu0 0
    %91 = vmatpush1.bf16.msra.mxu0 0
    %92 = vmatprep.subr.bf16.mxu0 0
    %93 = vmatpush1.bf16.msra.mxu0 0
    %94 = vmatprep.subr.bf16.mxu0 0
    %95 = vmatpush1.bf16.msra.mxu0 0
    %96 = vmatprep.subr.bf16.mxu0 0
    %97 = vmatpush1.bf16.msra.mxu0 0
    %98 = vmatprep.subr.bf16.mxu0 0
    %99 = vmatpush1.bf16.msra.mxu0 0
    %100 = vmatprep.subr.bf16.mxu0 0
    %101 = vmatpush1.bf16.msra.mxu0 0
    %102 = vmatprep.subr.bf16.mxu0 0
    %103 = vmatpush1.bf16.msra.mxu0 0
    %104 = vmatprep.subr.bf16.mxu0 0
    %105 = vmatpush1.bf16.msra.mxu0 0
    %106 = vmatprep.subr.bf16.mxu0 0
    %107 = vmatpush1.bf16.msra.mxu0 0
    %108 = vmatprep.subr.bf16.mxu0 0
    %109 = vmatpush1.bf16.msra.mxu0 0
    %110 = vmatprep.subr.bf16.mxu0 0
    %111 = vmatpush1.bf16.msra.mxu0 0
    %112 = vmatprep.subr.bf16.mxu0 0
    %113 = vmatpush1.bf16.msra.mxu0 0
    %114 = vmatprep.subr.bf16.mxu0 0
    %115 = vmatpush1.bf16.msra.mxu0 0
    %116 = vmatprep.mubr.bf16.mxu0 0
    %117 = vmatmul.mubr.bf16.gmra.mrb[0].mxu0 %v82
    %v118 = vpop.f32.mrb[0].mxu0
    %v119 = vadd.f32 %v53, %v118
    %v120 = vpop.f32.mrb[0].mxu0
    %v121 = vadd.f32 %v57, %v120
    %v122 = vpop.f32.mrb[0].mxu0
    %v123 = vpop.f32.mrb[0].mxu0
    %124 = vdwg.mxu0
    %v125 = vmax.f32 %v119, 0.0
    %v126 = vmax.f32 %v121, 0.0
    %v127 = vpack.c.bf16 %v125, %v125
    %v128 = vpack.c.bf16 %v126, %v126
    %v129 = vld [vmem:[#allocation2] sm:$0xff]
    %v130 = vld [vmem:[#allocation2 + $0x8] sm:$0xff]
    %v131 = vld [vmem:[#allocation2 + $0x10] sm:$0xff]
    %v132 = vld [vmem:[#allocation2 + $0x18] sm:$0xff]
    %v133 = vld [vmem:[#allocation2 + $0x20] sm:$0xff]
    %v134 = vld [vmem:[#allocation2 + $0x28] sm:$0xff]
    %v135 = vld [vmem:[#allocation2 + $0x30] sm:$0xff]
    %v136 = vld [vmem:[#allocation2 + $0x38] sm:$0xff]
    %v137 = vld [vmem:[#allocation2 + $0x40] sm:$0xff]
    %v138 = vld [vmem:[#allocation2 + $0x48] sm:$0xff]
    %v139 = vld [vmem:[#allocation2 + $0x50] sm:$0xff]
    %v140 = vld [vmem:[#allocation2 + $0x58] sm:$0xff]
    %v141 = vld [vmem:[#allocation2 + $0x60] sm:$0xff]
    %v142 = vld [vmem:[#allocation2 + $0x68] sm:$0xff]
    %v143 = vld [vmem:[#allocation2 + $0x70] sm:$0xff]
    %v144 = vld [vmem:[#allocation2 + $0x78] sm:$0xff]
    %v145 = vld [vmem:[#allocation2 + $0x80] sm:$0xff]
    %v146 = vld [vmem:[#allocation2 + $0x88] sm:$0xff]
    %v147 = vld [vmem:[#allocation2 + $0x90] sm:$0xff]
    %v148 = vld [vmem:[#allocation2 + $0x98] sm:$0xff]
    %v149 = vld [vmem:[#allocation2 + $0xa0] sm:$0xff]
    %v150 = vld [vmem:[#allocation2 + $0xa8] sm:$0xff]
    %v151 = vld [vmem:[#allocation2 + $0xb0] sm:$0xff]
    %v152 = vld [vmem:[#allocation2 + $0xb8] sm:$0xff]
    %v153 = vld [vmem:[#allocation2 + $0xc0] sm:$0xff]
    %v154 = vld [vmem:[#allocation2 + $0xc8] sm:$0xff]
    %v155 = vld [vmem:[#allocation2 + $0xd0] sm:$0xff]
    %v156 = vld [vmem:[#allocation2 + $0xd8] sm:$0xff]
    %v157 = vld [vmem:[#allocation2 + $0xe0] sm:$0xff]
    %v158 = vld [vmem:[#allocation2 + $0xe8] sm:$0xff]
    %v159 = vld [vmem:[#allocation2 + $0xf0] sm:$0xff]
    %v160 = vld [vmem:[#allocation2 + $0xf8] sm:$0xff]
    %v161 = vld [vmem:[#allocation2 + $0x100] sm:$0xff]
    %v162 = vld [vmem:[#allocation2 + $0x108] sm:$0xff]
    %v163 = vld [vmem:[#allocation2 + $0x110] sm:$0xff]
    %v164 = vld [vmem:[#allocation2 + $0x118] sm:$0xff]
    %v165 = vld [vmem:[#allocation2 + $0x120] sm:$0xff]
    %v166 = vld [vmem:[#allocation2 + $0x128] sm:$0xff]
    %v167 = vld [vmem:[#allocation2 + $0x130] sm:$0xff]
    %v168 = vld [vmem:[#allocation2 + $0x138] sm:$0xff]
    %v169 = vld [vmem:[#allocation2 + $0x140] sm:$0xff]
    %v170 = vld [vmem:[#allocation2 + $0x148] sm:$0xff]
    %v171 = vld [vmem:[#allocation2 + $0x150] sm:$0xff]
    %v172 = vld [vmem:[#allocation2 + $0x158] sm:$0xff]
    %v173 = vld [vmem:[#allocation2 + $0x160] sm:$0xff]
    %v174 = vld [vmem:[#allocation2 + $0x168] sm:$0xff]
    %v175 = vld [vmem:[#allocation2 + $0x170] sm:$0xff]
    %v176 = vld [vmem:[#allocation2 + $0x178] sm:$0xff]
    %v177 = vld [vmem:[#allocation2 + $0x180] sm:$0xff]
    %v178 = vld [vmem:[#allocation2 + $0x188] sm:$0xff]
    %v179 = vld [vmem:[#allocation2 + $0x190] sm:$0xff]
    %v180 = vld [vmem:[#allocation2 + $0x198] sm:$0xff]
    %v181 = vld [vmem:[#allocation2 + $0x1a0] sm:$0xff]
    %v182 = vld [vmem:[#allocation2 + $0x1a8] sm:$0xff]
    %v183 = vld [vmem:[#allocation2 + $0x1b0] sm:$0xff]
    %v184 = vld [vmem:[#allocation2 + $0x1b8] sm:$0xff]
    %v185 = vld [vmem:[#allocation2 + $0x1c0] sm:$0xff]
    %v186 = vld [vmem:[#allocation2 + $0x1c8] sm:$0xff]
    %v187 = vld [vmem:[#allocation2 + $0x1d0] sm:$0xff]
    %v188 = vld [vmem:[#allocation2 + $0x1d8] sm:$0xff]
    %v189 = vld [vmem:[#allocation2 + $0x1e0] sm:$0xff]
    %v190 = vld [vmem:[#allocation2 + $0x1e8] sm:$0xff]
    %v191 = vld [vmem:[#allocation2 + $0x1f0] sm:$0xff]
    %v192 = vld [vmem:[#allocation2 + $0x1f8] sm:$0xff]
    %v193 = vld [vmem:[%s4] sm:$0xf]
    %v195 = vlaneseq
    %v196 = vshrl.u32 %v195, 7
    %v197 = vsub.s32 0, %v196
    %v198 = vrot.slane %v193, %v197
    %v199 = vlaneseq
    %v200 = vshrl.u32 %v199, 7
    %v201 = vsub.s32 1, %v200
    %v202 = vrot.slane %v193, %v201
    %v203 = vlaneseq
    %v204 = vshrl.u32 %v203, 7
    %v205 = vsub.s32 2, %v204
    %v206 = vrot.slane %v193, %v205
    %v207 = vlaneseq
    %v208 = vshrl.u32 %v207, 7
    %v209 = vsub.s32 3, %v208
    %v210 = vrot.slane %v193, %v209
    %v279 = vunpack.c.l.b16 %v129
    %v280 = vunpack.c.h.b16 %v129
    %v281 = vunpack.c.l.b16 %v130
    %v282 = vunpack.c.h.b16 %v130
    %v283 = vunpack.c.l.b16 %v131
    %v284 = vunpack.c.h.b16 %v131
    %v285 = vunpack.c.l.b16 %v132
    %v286 = vunpack.c.h.b16 %v132
    %v287 = vunpack.c.l.b16 %v133
    %v288 = vunpack.c.h.b16 %v133
    %v289 = vunpack.c.l.b16 %v134
    %v290 = vunpack.c.h.b16 %v134
    %v291 = vunpack.c.l.b16 %v135
    %v292 = vunpack.c.h.b16 %v135
    %v293 = vunpack.c.l.b16 %v136
    %v294 = vunpack.c.h.b16 %v136
    %v295 = vunpack.c.l.b16 %v137
    %v296 = vunpack.c.h.b16 %v137
    %v297 = vunpack.c.l.b16 %v138
    %v298 = vunpack.c.h.b16 %v138
    %v299 = vunpack.c.l.b16 %v139
    %v300 = vunpack.c.h.b16 %v139
    %v301 = vunpack.c.l.b16 %v140
    %v302 = vunpack.c.h.b16 %v140
    %v303 = vunpack.c.l.b16 %v141
    %v304 = vunpack.c.h.b16 %v141
    %v305 = vunpack.c.l.b16 %v142
    %v306 = vunpack.c.h.b16 %v142
    %v307 = vunpack.c.l.b16 %v143
    %v308 = vunpack.c.h.b16 %v143
    %v309 = vunpack.c.l.b16 %v144
    %v310 = vunpack.c.h.b16 %v144
    %v311 = vunpack.c.l.b16 %v145
    %v312 = vunpack.c.h.b16 %v145
    %v313 = vunpack.c.l.b16 %v146
    %v314 = vunpack.c.h.b16 %v146
    %v315 = vunpack.c.l.b16 %v147
    %v316 = vunpack.c.h.b16 %v147
    %v317 = vunpack.c.l.b16 %v148
    %v318 = vunpack.c.h.b16 %v148
    %v319 = vunpack.c.l.b16 %v149
    %v320 = vunpack.c.h.b16 %v149
    %v321 = vunpack.c.l.b16 %v150
    %v322 = vunpack.c.h.b16 %v150
    %v323 = vunpack.c.l.b16 %v151
    %v324 = vunpack.c.h.b16 %v151
    %v325 = vunpack.c.l.b16 %v152
    %v326 = vunpack.c.h.b16 %v152
    %v327 = vunpack.c.l.b16 %v153
    %v328 = vunpack.c.h.b16 %v153
    %v329 = vunpack.c.l.b16 %v154
    %v330 = vunpack.c.h.b16 %v154
    %v331 = vunpack.c.l.b16 %v155
    %v332 = vunpack.c.h.b16 %v155
    %v333 = vunpack.c.l.b16 %v156
    %v334 = vunpack.c.h.b16 %v156
    %v335 = vunpack.c.l.b16 %v157
    %v336 = vunpack.c.h.b16 %v157
    %v337 = vunpack.c.l.b16 %v158
    %v338 = vunpack.c.h.b16 %v158
    %v339 = vunpack.c.l.b16 %v159
    %v340 = vunpack.c.h.b16 %v159
    %v341 = vunpack.c.l.b16 %v160
    %v342 = vunpack.c.h.b16 %v160
    %v343 = vunpack.c.l.b16 %v161
    %v344 = vunpack.c.h.b16 %v161
    %v345 = vunpack.c.l.b16 %v162
    %v346 = vunpack.c.h.b16 %v162
    %v347 = vunpack.c.l.b16 %v163
    %v348 = vunpack.c.h.b16 %v163
    %v349 = vunpack.c.l.b16 %v164
    %v350 = vunpack.c.h.b16 %v164
    %v351 = vunpack.c.l.b16 %v165
    %v352 = vunpack.c.h.b16 %v165
    %v353 = vunpack.c.l.b16 %v166
    %v354 = vunpack.c.h.b16 %v166
    %v355 = vunpack.c.l.b16 %v167
    %v356 = vunpack.c.h.b16 %v167
    %v357 = vunpack.c.l.b16 %v168
    %v358 = vunpack.c.h.b16 %v168
    %v359 = vunpack.c.l.b16 %v169
    %v360 = vunpack.c.h.b16 %v169
    %v361 = vunpack.c.l.b16 %v170
    %v362 = vunpack.c.h.b16 %v170
    %v363 = vunpack.c.l.b16 %v171
    %v364 = vunpack.c.h.b16 %v171
    %v365 = vunpack.c.l.b16 %v172
    %v366 = vunpack.c.h.b16 %v172
    %v367 = vunpack.c.l.b16 %v173
    %v368 = vunpack.c.h.b16 %v173
    %v369 = vunpack.c.l.b16 %v174
    %v370 = vunpack.c.h.b16 %v174
    %v371 = vunpack.c.l.b16 %v175
    %v372 = vunpack.c.h.b16 %v175
    %v373 = vunpack.c.l.b16 %v176
    %v374 = vunpack.c.h.b16 %v176
    %v375 = vunpack.c.l.b16 %v177
    %v376 = vunpack.c.h.b16 %v177
    %v377 = vunpack.c.l.b16 %v178
    %v378 = vunpack.c.h.b16 %v178
    %v379 = vunpack.c.l.b16 %v179
    %v380 = vunpack.c.h.b16 %v179
    %v381 = vunpack.c.l.b16 %v180
    %v382 = vunpack.c.h.b16 %v180
    %v383 = vunpack.c.l.b16 %v181
    %v384 = vunpack.c.h.b16 %v181
    %v385 = vunpack.c.l.b16 %v182
    %v386 = vunpack.c.h.b16 %v182
    %v387 = vunpack.c.l.b16 %v183
    %v388 = vunpack.c.h.b16 %v183
    %v389 = vunpack.c.l.b16 %v184
    %v390 = vunpack.c.h.b16 %v184
    %v391 = vunpack.c.l.b16 %v185
    %v392 = vunpack.c.h.b16 %v185
    %v393 = vunpack.c.l.b16 %v186
    %v394 = vunpack.c.h.b16 %v186
    %v395 = vunpack.c.l.b16 %v187
    %v396 = vunpack.c.h.b16 %v187
    %v397 = vunpack.c.l.b16 %v188
    %v398 = vunpack.c.h.b16 %v188
    %v399 = vunpack.c.l.b16 %v189
    %v400 = vunpack.c.h.b16 %v189
    %v401 = vunpack.c.l.b16 %v190
    %v402 = vunpack.c.h.b16 %v190
    %v403 = vunpack.c.l.b16 %v191
    %v404 = vunpack.c.h.b16 %v191
    %v405 = vunpack.c.l.b16 %v192
    %v406 = vunpack.c.h.b16 %v192
    %v407 = vpack.c.b16 %v283, %v279
    %v408 = vpack.c.b16 %v284, %v280
    %v409 = vpack.c.b16 %v285, %v281
    %v410 = vpack.c.b16 %v286, %v282
    %v411 = vpack.c.b16 %v291, %v287
    %v412 = vpack.c.b16 %v292, %v288
    %v413 = vpack.c.b16 %v293, %v289
    %v414 = vpack.c.b16 %v294, %v290
    %v415 = vpack.c.b16 %v299, %v295
    %v416 = vpack.c.b16 %v300, %v296
    %v417 = vpack.c.b16 %v301, %v297
    %v418 = vpack.c.b16 %v302, %v298
    %v419 = vpack.c.b16 %v307, %v303
    %v420 = vpack.c.b16 %v308, %v304
    %v421 = vpack.c.b16 %v309, %v305
    %v422 = vpack.c.b16 %v310, %v306
    %v423 = vpack.c.b16 %v315, %v311
    %v424 = vpack.c.b16 %v316, %v312
    %v425 = vpack.c.b16 %v317, %v313
    %v426 = vpack.c.b16 %v318, %v314
    %v427 = vpack.c.b16 %v323, %v319
    %v428 = vpack.c.b16 %v324, %v320
    %v429 = vpack.c.b16 %v325, %v321
    %v430 = vpack.c.b16 %v326, %v322
    %v431 = vpack.c.b16 %v331, %v327
    %v432 = vpack.c.b16 %v332, %v328
    %v433 = vpack.c.b16 %v333, %v329
    %v434 = vpack.c.b16 %v334, %v330
    %v435 = vpack.c.b16 %v339, %v335
    %v436 = vpack.c.b16 %v340, %v336
    %v437 = vpack.c.b16 %v341, %v337
    %v438 = vpack.c.b16 %v342, %v338
    %v439 = vpack.c.b16 %v347, %v343
    %v440 = vpack.c.b16 %v348, %v344
    %v441 = vpack.c.b16 %v349, %v345
    %v442 = vpack.c.b16 %v350, %v346
    %v443 = vpack.c.b16 %v355, %v351
    %v444 = vpack.c.b16 %v356, %v352
    %v445 = vpack.c.b16 %v357, %v353
    %v446 = vpack.c.b16 %v358, %v354
    %v447 = vpack.c.b16 %v363, %v359
    %v448 = vpack.c.b16 %v364, %v360
    %v449 = vpack.c.b16 %v365, %v361
    %v450 = vpack.c.b16 %v366, %v362
    %v451 = vpack.c.b16 %v371, %v367
    %v452 = vpack.c.b16 %v372, %v368
    %v453 = vpack.c.b16 %v373, %v369
    %v454 = vpack.c.b16 %v374, %v370
    %v455 = vpack.c.b16 %v379, %v375
    %v456 = vpack.c.b16 %v380, %v376
    %v457 = vpack.c.b16 %v381, %v377
    %v458 = vpack.c.b16 %v382, %v378
    %v459 = vpack.c.b16 %v387, %v383
    %v460 = vpack.c.b16 %v388, %v384
    %v461 = vpack.c.b16 %v389, %v385
    %v462 = vpack.c.b16 %v390, %v386
    %v463 = vpack.c.b16 %v395, %v391
    %v464 = vpack.c.b16 %v396, %v392
    %v465 = vpack.c.b16 %v397, %v393
    %v466 = vpack.c.b16 %v398, %v394
    %v467 = vpack.c.b16 %v403, %v399
    %v468 = vpack.c.b16 %v404, %v400
    %v469 = vpack.c.b16 %v405, %v401
    %v470 = vpack.c.b16 %v406, %v402
    %535 = vmatprep.subr.bf16.mxu0 %v408
    %536 = vmatpush1.bf16.msra.mxu0 %v407
    %537 = vmatprep.subr.bf16.mxu0 %v412
    %538 = vmatpush1.bf16.msra.mxu0 %v411
    %539 = vmatprep.subr.bf16.mxu0 %v416
    %540 = vmatpush1.bf16.msra.mxu0 %v415
    %541 = vmatprep.subr.bf16.mxu0 %v420
    %542 = vmatpush1.bf16.msra.mxu0 %v419
    %543 = vmatprep.subr.bf16.mxu0 %v424
    %544 = vmatpush1.bf16.msra.mxu0 %v423
    %545 = vmatprep.subr.bf16.mxu0 %v428
    %546 = vmatpush1.bf16.msra.mxu0 %v427
    %547 = vmatprep.subr.bf16.mxu0 %v432
    %548 = vmatpush1.bf16.msra.mxu0 %v431
    %549 = vmatprep.subr.bf16.mxu0 %v436
    %550 = vmatpush1.bf16.msra.mxu0 %v435
    %551 = vmatprep.subr.bf16.mxu0 %v440
    %552 = vmatpush1.bf16.msra.mxu0 %v439
    %553 = vmatprep.subr.bf16.mxu0 %v444
    %554 = vmatpush1.bf16.msra.mxu0 %v443
    %555 = vmatprep.subr.bf16.mxu0 %v448
    %556 = vmatpush1.bf16.msra.mxu0 %v447
    %557 = vmatprep.subr.bf16.mxu0 %v452
    %558 = vmatpush1.bf16.msra.mxu0 %v451
    %559 = vmatprep.subr.bf16.mxu0 %v456
    %560 = vmatpush1.bf16.msra.mxu0 %v455
    %561 = vmatprep.subr.bf16.mxu0 %v460
    %562 = vmatpush1.bf16.msra.mxu0 %v459
    %563 = vmatprep.subr.bf16.mxu0 %v464
    %564 = vmatpush1.bf16.msra.mxu0 %v463
    %565 = vmatprep.subr.bf16.mxu0 %v468
    %566 = vmatpush1.bf16.msra.mxu0 %v467
    %567 = vmatprep.mubr.bf16.mxu0 %v128
    %568 = vmatmul.mubr.bf16.gmra.mrb[0].mxu0 %v127
    %v569 = vpop.f32.mrb[0].mxu0
    %v570 = vadd.f32 %v198, %v569
    %v571 = vpop.f32.mrb[0].mxu0
    %v572 = vadd.f32 %v202, %v571
    %v573 = vpop.f32.mrb[0].mxu0
    %v574 = vpop.f32.mrb[0].mxu0
    %575 = vdwg.mxu0
    %576 = vmatprep.subr.bf16.mxu0 %v410
    %577 = vmatpush1.bf16.msra.mxu0 %v409
    %578 = vmatprep.subr.bf16.mxu0 %v414
    %579 = vmatpush1.bf16.msra.mxu0 %v413
    %580 = vmatprep.subr.bf16.mxu0 %v418
    %581 = vmatpush1.bf16.msra.mxu0 %v417
    %582 = vmatprep.subr.bf16.mxu0 %v422
    %583 = vmatpush1.bf16.msra.mxu0 %v421
    %584 = vmatprep.subr.bf16.mxu0 %v426
    %585 = vmatpush1.bf16.msra.mxu0 %v425
    %586 = vmatprep.subr.bf16.mxu0 %v430
    %587 = vmatpush1.bf16.msra.mxu0 %v429
    %588 = vmatprep.subr.bf16.mxu0 %v434
    %589 = vmatpush1.bf16.msra.mxu0 %v433
    %590 = vmatprep.subr.bf16.mxu0 %v438
    %591 = vmatpush1.bf16.msra.mxu0 %v437
    %592 = vmatprep.subr.bf16.mxu0 %v442
    %593 = vmatpush1.bf16.msra.mxu0 %v441
    %594 = vmatprep.subr.bf16.mxu0 %v446
    %595 = vmatpush1.bf16.msra.mxu0 %v445
    %596 = vmatprep.subr.bf16.mxu0 %v450
    %597 = vmatpush1.bf16.msra.mxu0 %v449
    %598 = vmatprep.subr.bf16.mxu0 %v454
    %599 = vmatpush1.bf16.msra.mxu0 %v453
    %600 = vmatprep.subr.bf16.mxu0 %v458
    %601 = vmatpush1.bf16.msra.mxu0 %v457
    %602 = vmatprep.subr.bf16.mxu0 %v462
    %603 = vmatpush1.bf16.msra.mxu0 %v461
    %604 = vmatprep.subr.bf16.mxu0 %v466
    %605 = vmatpush1.bf16.msra.mxu0 %v465
    %606 = vmatprep.subr.bf16.mxu0 %v470
    %607 = vmatpush1.bf16.msra.mxu0 %v469
    %608 = vmatprep.mubr.bf16.mxu0 %v128
    %609 = vmatmul.mubr.bf16.gmra.mrb[0].mxu0 %v127
    %v610 = vpop.f32.mrb[0].mxu0
    %v611 = vadd.f32 %v206, %v610
    %v612 = vpop.f32.mrb[0].mxu0
    %v613 = vadd.f32 %v210, %v612
    %v614 = vpop.f32.mrb[0].mxu0
    %v615 = vpop.f32.mrb[0].mxu0
    %616 = vdwg.mxu0
    %v617 = vmax.f32 %v570, 0.0
    %v618 = vmax.f32 %v572, 0.0
    %v619 = vmax.f32 %v611, 0.0
    %v620 = vmax.f32 %v613, 0.0
    %v621 = vpack.c.bf16 %v617, %v617
    %v622 = vpack.c.bf16 %v618, %v618
    %v623 = vpack.c.bf16 %v619, %v619
    %v624 = vpack.c.bf16 %v620, %v620
    %v625 = vld [vmem:[%s5] sm:$0xf]
    %v626 = vld [vmem:[%s5 + $0x4] sm:$0xf]
    %v627 = vld [vmem:[%s5 + $0x8] sm:$0xf]
    %v628 = vld [vmem:[%s5 + $0xc] sm:$0xf]
    %v629 = vld [vmem:[%s5 + $0x10] sm:$0xf]
    %v630 = vld [vmem:[%s5 + $0x14] sm:$0xf]
    %v631 = vld [vmem:[%s5 + $0x18] sm:$0xf]
    %v632 = vld [vmem:[%s5 + $0x1c] sm:$0xf]
    %v633 = vld [vmem:[%s5 + $0x20] sm:$0xf]
    %v634 = vld [vmem:[%s5 + $0x24] sm:$0xf]
    %v635 = vld [vmem:[%s5 + $0x28] sm:$0xf]
    %v636 = vld [vmem:[%s5 + $0x2c] sm:$0xf]
    %v637 = vld [vmem:[%s5 + $0x30] sm:$0xf]
    %v638 = vld [vmem:[%s5 + $0x34] sm:$0xf]
    %v639 = vld [vmem:[%s5 + $0x38] sm:$0xf]
    %v640 = vld [vmem:[%s5 + $0x3c] sm:$0xf]
    %v641 = vld [vmem:[%s5 + $0x40] sm:$0xf]
    %v642 = vld [vmem:[%s5 + $0x44] sm:$0xf]
    %v643 = vld [vmem:[%s5 + $0x48] sm:$0xf]
    %v644 = vld [vmem:[%s5 + $0x4c] sm:$0xf]
    %v645 = vld [vmem:[%s5 + $0x50] sm:$0xf]
    %v646 = vld [vmem:[%s5 + $0x54] sm:$0xf]
    %v647 = vld [vmem:[%s5 + $0x58] sm:$0xf]
    %v648 = vld [vmem:[%s5 + $0x5c] sm:$0xf]
    %v649 = vld [vmem:[%s5 + $0x60] sm:$0xf]
    %v650 = vld [vmem:[%s5 + $0x64] sm:$0xf]
    %v651 = vld [vmem:[%s5 + $0x68] sm:$0xf]
    %v652 = vld [vmem:[%s5 + $0x6c] sm:$0xf]
    %v653 = vld [vmem:[%s5 + $0x70] sm:$0xf]
    %v654 = vld [vmem:[%s5 + $0x74] sm:$0xf]
    %v655 = vld [vmem:[%s5 + $0x78] sm:$0xf]
    %v656 = vld [vmem:[%s5 + $0x7c] sm:$0xf]
    %v657 = vld [vmem:[%s5 + $0x80] sm:$0xf]
    %v658 = vld [vmem:[%s5 + $0x84] sm:$0xf]
    %v659 = vld [vmem:[%s5 + $0x88] sm:$0xf]
    %v660 = vld [vmem:[%s5 + $0x8c] sm:$0xf]
    %v661 = vld [vmem:[%s5 + $0x90] sm:$0xf]
    %v662 = vld [vmem:[%s5 + $0x94] sm:$0xf]
    %v663 = vld [vmem:[%s5 + $0x98] sm:$0xf]
    %v664 = vld [vmem:[%s5 + $0x9c] sm:$0xf]
    %v665 = vld [vmem:[%s5 + $0xa0] sm:$0xf]
    %v666 = vld [vmem:[%s5 + $0xa4] sm:$0xf]
    %v667 = vld [vmem:[%s5 + $0xa8] sm:$0xf]
    %v668 = vld [vmem:[%s5 + $0xac] sm:$0xf]
    %v669 = vld [vmem:[%s5 + $0xb0] sm:$0xf]
    %v670 = vld [vmem:[%s5 + $0xb4] sm:$0xf]
    %v671 = vld [vmem:[%s5 + $0xb8] sm:$0xf]
    %v672 = vld [vmem:[%s5 + $0xbc] sm:$0xf]
    %v673 = vld [vmem:[%s5 + $0xc0] sm:$0xf]
    %v674 = vld [vmem:[%s5 + $0xc4] sm:$0xf]
    %v675 = vld [vmem:[%s5 + $0xc8] sm:$0xf]
    %v676 = vld [vmem:[%s5 + $0xcc] sm:$0xf]
    %v677 = vld [vmem:[%s5 + $0xd0] sm:$0xf]
    %v678 = vld [vmem:[%s5 + $0xd4] sm:$0xf]
    %v679 = vld [vmem:[%s5 + $0xd8] sm:$0xf]
    %v680 = vld [vmem:[%s5 + $0xdc] sm:$0xf]
    %v681 = vld [vmem:[%s5 + $0xe0] sm:$0xf]
    %v682 = vld [vmem:[%s5 + $0xe4] sm:$0xf]
    %v683 = vld [vmem:[%s5 + $0xe8] sm:$0xf]
    %v684 = vld [vmem:[%s5 + $0xec] sm:$0xf]
    %v685 = vld [vmem:[%s5 + $0xf0] sm:$0xf]
    %v686 = vld [vmem:[%s5 + $0xf4] sm:$0xf]
    %v687 = vld [vmem:[%s5 + $0xf8] sm:$0xf]
    %v688 = vld [vmem:[%s5 + $0xfc] sm:$0xf]
    %v689 = vld [vmem:[%s6] sm:$0x1]
    %v691 = vlaneseq
    %v692 = vshrl.u32 %v691, 7
    %v693 = vsub.s32 0, %v692
    %v694 = vrot.slane %v689, %v693
    %v760 = vunpack.c.l.b16 %v625
    %v761 = vunpack.c.l.b16 %v626
    %v762 = vunpack.c.l.b16 %v627
    %v763 = vunpack.c.l.b16 %v628
    %v764 = vunpack.c.l.b16 %v629
    %v765 = vunpack.c.l.b16 %v630
    %v766 = vunpack.c.l.b16 %v631
    %v767 = vunpack.c.l.b16 %v632
    %v768 = vunpack.c.l.b16 %v633
    %v769 = vunpack.c.l.b16 %v634
    %v770 = vunpack.c.l.b16 %v635
    %v771 = vunpack.c.l.b16 %v636
    %v772 = vunpack.c.l.b16 %v637
    %v773 = vunpack.c.l.b16 %v638
    %v774 = vunpack.c.l.b16 %v639
    %v775 = vunpack.c.l.b16 %v640
    %v776 = vunpack.c.l.b16 %v641
    %v777 = vunpack.c.l.b16 %v642
    %v778 = vunpack.c.l.b16 %v643
    %v779 = vunpack.c.l.b16 %v644
    %v780 = vunpack.c.l.b16 %v645
    %v781 = vunpack.c.l.b16 %v646
    %v782 = vunpack.c.l.b16 %v647
    %v783 = vunpack.c.l.b16 %v648
    %v784 = vunpack.c.l.b16 %v649
    %v785 = vunpack.c.l.b16 %v650
    %v786 = vunpack.c.l.b16 %v651
    %v787 = vunpack.c.l.b16 %v652
    %v788 = vunpack.c.l.b16 %v653
    %v789 = vunpack.c.l.b16 %v654
    %v790 = vunpack.c.l.b16 %v655
    %v791 = vunpack.c.l.b16 %v656
    %v792 = vunpack.c.l.b16 %v657
    %v793 = vunpack.c.l.b16 %v658
    %v794 = vunpack.c.l.b16 %v659
    %v795 = vunpack.c.l.b16 %v660
    %v796 = vunpack.c.l.b16 %v661
    %v797 = vunpack.c.l.b16 %v662
    %v798 = vunpack.c.l.b16 %v663
    %v799 = vunpack.c.l.b16 %v664
    %v800 = vunpack.c.l.b16 %v665
    %v801 = vunpack.c.l.b16 %v666
    %v802 = vunpack.c.l.b16 %v667
    %v803 = vunpack.c.l.b16 %v668
    %v804 = vunpack.c.l.b16 %v669
    %v805 = vunpack.c.l.b16 %v670
    %v806 = vunpack.c.l.b16 %v671
    %v807 = vunpack.c.l.b16 %v672
    %v808 = vunpack.c.l.b16 %v673
    %v809 = vunpack.c.l.b16 %v674
    %v810 = vunpack.c.l.b16 %v675
    %v811 = vunpack.c.l.b16 %v676
    %v812 = vunpack.c.l.b16 %v677
    %v813 = vunpack.c.l.b16 %v678
    %v814 = vunpack.c.l.b16 %v679
    %v815 = vunpack.c.l.b16 %v680
    %v816 = vunpack.c.l.b16 %v681
    %v817 = vunpack.c.l.b16 %v682
    %v818 = vunpack.c.l.b16 %v683
    %v819 = vunpack.c.l.b16 %v684
    %v820 = vunpack.c.l.b16 %v685
    %v821 = vunpack.c.l.b16 %v686
    %v822 = vunpack.c.l.b16 %v687
    %v823 = vunpack.c.l.b16 %v688
    %v824 = vpack.c.b16 %v761, %v760
    %v825 = vpack.c.b16 %v763, %v762
    %v826 = vpack.c.b16 %v765, %v764
    %v827 = vpack.c.b16 %v767, %v766
    %v828 = vpack.c.b16 %v769, %v768
    %v829 = vpack.c.b16 %v771, %v770
    %v830 = vpack.c.b16 %v773, %v772
    %v831 = vpack.c.b16 %v775, %v774
    %v832 = vpack.c.b16 %v777, %v776
    %v833 = vpack.c.b16 %v779, %v778
    %v834 = vpack.c.b16 %v781, %v780
    %v835 = vpack.c.b16 %v783, %v782
    %v836 = vpack.c.b16 %v785, %v784
    %v837 = vpack.c.b16 %v787, %v786
    %v838 = vpack.c.b16 %v789, %v788
    %v839 = vpack.c.b16 %v791, %v790
    %v840 = vpack.c.b16 %v793, %v792
    %v841 = vpack.c.b16 %v795, %v794
    %v842 = vpack.c.b16 %v797, %v796
    %v843 = vpack.c.b16 %v799, %v798
    %v844 = vpack.c.b16 %v801, %v800
    %v845 = vpack.c.b16 %v803, %v802
    %v846 = vpack.c.b16 %v805, %v804
    %v847 = vpack.c.b16 %v807, %v806
    %v848 = vpack.c.b16 %v809, %v808
    %v849 = vpack.c.b16 %v811, %v810
    %v850 = vpack.c.b16 %v813, %v812
    %v851 = vpack.c.b16 %v815, %v814
    %v852 = vpack.c.b16 %v817, %v816
    %v853 = vpack.c.b16 %v819, %v818
    %v854 = vpack.c.b16 %v821, %v820
    %v855 = vpack.c.b16 %v823, %v822
    %888 = vmatprep.subr.bf16.mxu0 0
    %889 = vmatpush1.bf16.msra.mxu0 %v824
    %890 = vmatprep.subr.bf16.mxu0 0
    %891 = vmatpush1.bf16.msra.mxu0 %v825
    %892 = vmatprep.subr.bf16.mxu0 0
    %893 = vmatpush1.bf16.msra.mxu0 %v826
    %894 = vmatprep.subr.bf16.mxu0 0
    %895 = vmatpush1.bf16.msra.mxu0 %v827
    %896 = vmatprep.subr.bf16.mxu0 0
    %897 = vmatpush1.bf16.msra.mxu0 %v828
    %898 = vmatprep.subr.bf16.mxu0 0
    %899 = vmatpush1.bf16.msra.mxu0 %v829
    %900 = vmatprep.subr.bf16.mxu0 0
    %901 = vmatpush1.bf16.msra.mxu0 %v830
    %902 = vmatprep.subr.bf16.mxu0 0
    %903 = vmatpush1.bf16.msra.mxu0 %v831
    %904 = vmatprep.subr.bf16.mxu0 0
    %905 = vmatpush1.bf16.msra.mxu0 %v832
    %906 = vmatprep.subr.bf16.mxu0 0
    %907 = vmatpush1.bf16.msra.mxu0 %v833
    %908 = vmatprep.subr.bf16.mxu0 0
    %909 = vmatpush1.bf16.msra.mxu0 %v834
    %910 = vmatprep.subr.bf16.mxu0 0
    %911 = vmatpush1.bf16.msra.mxu0 %v835
    %912 = vmatprep.subr.bf16.mxu0 0
    %913 = vmatpush1.bf16.msra.mxu0 %v836
    %914 = vmatprep.subr.bf16.mxu0 0
    %915 = vmatpush1.bf16.msra.mxu0 %v837
    %916 = vmatprep.subr.bf16.mxu0 0
    %917 = vmatpush1.bf16.msra.mxu0 %v838
    %918 = vmatprep.subr.bf16.mxu0 0
    %919 = vmatpush1.bf16.msra.mxu0 %v839
    %920 = vmatprep.mubr.bf16.mxu0 %v622
    %921 = vmatmul.mubr.bf16.gmra.mrb[0].mxu0 %v621
    %v922 = vpop.f32.mrb[0].mxu0
    %v923 = vadd.f32 %v694, %v922
    %v924 = vpop.f32.mrb[0].mxu0
    %v925 = vpop.f32.mrb[0].mxu0
    %v926 = vpop.f32.mrb[0].mxu0
    %927 = vdwg.mxu0
    %928 = vmatprep.subr.bf16.mxu0 0
    %929 = vmatpush1.bf16.msra.mxu0 %v840
    %930 = vmatprep.subr.bf16.mxu0 0
    %931 = vmatpush1.bf16.msra.mxu0 %v841
    %932 = vmatprep.subr.bf16.mxu0 0
    %933 = vmatpush1.bf16.msra.mxu0 %v842
    %934 = vmatprep.subr.bf16.mxu0 0
    %935 = vmatpush1.bf16.msra.mxu0 %v843
    %936 = vmatprep.subr.bf16.mxu0 0
    %937 = vmatpush1.bf16.msra.mxu0 %v844
    %938 = vmatprep.subr.bf16.mxu0 0
    %939 = vmatpush1.bf16.msra.mxu0 %v845
    %940 = vmatprep.subr.bf16.mxu0 0
    %941 = vmatpush1.bf16.msra.mxu0 %v846
    %942 = vmatprep.subr.bf16.mxu0 0
    %943 = vmatpush1.bf16.msra.mxu0 %v847
    %944 = vmatprep.subr.bf16.mxu0 0
    %945 = vmatpush1.bf16.msra.mxu0 %v848
    %946 = vmatprep.subr.bf16.mxu0 0
    %947 = vmatpush1.bf16.msra.mxu0 %v849
    %948 = vmatprep.subr.bf16.mxu0 0
    %949 = vmatpush1.bf16.msra.mxu0 %v850
    %950 = vmatprep.subr.bf16.mxu0 0
    %951 = vmatpush1.bf16.msra.mxu0 %v851
    %952 = vmatprep.subr.bf16.mxu0 0
    %953 = vmatpush1.bf16.msra.mxu0 %v852
    %954 = vmatprep.subr.bf16.mxu0 0
    %955 = vmatpush1.bf16.msra.mxu0 %v853
    %956 = vmatprep.subr.bf16.mxu0 0
    %957 = vmatpush1.bf16.msra.mxu0 %v854
    %958 = vmatprep.subr.bf16.mxu0 0
    %959 = vmatpush1.bf16.msra.mxu0 %v855
    %960 = vmatprep.mubr.bf16.mxu0 %v624
    %961 = vmatmul.mubr.bf16.gmra.mrb[0].mxu0 %v623
    %v962 = vpop.f32.mrb[0].mxu0
    %v963 = vadd.f32 %v923, %v962
    %v964 = vpop.f32.mrb[0].mxu0
    %v965 = vpop.f32.mrb[0].mxu0
    %v966 = vpop.f32.mrb[0].mxu0
    %967 = vdwg.mxu0
    %v968 = vpack.c.bf16 %v963, %v963
    %vm969 = vcmask 257024
    %970 = vst.msk [vmem:[#allocation5] sm:$0xf] %vm969, %v968
    // Predicated region
    $region34: #{tpu_custom_call.1} parent=1 // pred_check
      _
    $region35: #{tpu_custom_call.1} parent=1 // pred_check_branch
      %972 = sbr.rel (0) target = $region37
    $region36: #{tpu_custom_call.1} parent=1 // pred_region
      %s974 = ssub.s32 64, 64
      %975 = vsyncadd [#allocation4], %s974
      %s977 = sshll.u32 [#allocation5], 4
      %s978 = int_to_ptr.vmem [resolvable:$true] %s977
      %980 = dma.vmem_to_hbm [thread:$0]  %s978, 64, %s7, [#allocation4]
    $region37: #{tpu_custom_call.1} parent=1 // pred_fallthru
      _
    // Predicated region
    $region38: #{tpu_custom_call.1} parent=1 // pred_check
      _
    $region39: #{tpu_custom_call.1} parent=1 // pred_check_branch
      %982 = sbr.rel (0) target = $region41
    $region40: #{tpu_custom_call.1} parent=1 // pred_region
      %983 = dma.done [#allocation4], 64
    $region41: #{tpu_custom_call.1} parent=1 // pred_fallthru
      _
    %984 = vsyncpa [#allocation3], 1
    %985 = vsyncpa [#allocation4], 1

</llo_original>
